<compile_context>
chip_gen: v6e
topology: v6e:2x2x1
jax: 0.10.0
libtpu: 0.0.40
codegen_flags: <defaults>
</compile_context>

<pallas_src>
import jax
import jax.numpy as jnp
from jax.experimental import pallas as pl
from jax.experimental.pallas import tpu as pltpu


def _num_tensorcores() -> int:
    """Best-effort TensorCores-per-device (v7x / megacore parts -> 2)."""
    try:
        kind = jax.devices()[0].device_kind.lower()
    except Exception:
        return 1
    return 2 if any(tag in kind for tag in ("7x", "v7", "v4", "v5p")) else 1


def _vmem_capacity_bytes() -> int:
    try:
        return int(pltpu.get_tpu_info().vmem_capacity_bytes)
    except Exception:
        return 64 * 1024 * 1024  # conservative default (v7x per-TC VMEM)


def _make_kernel(N, C, Cc, S, TB, NBh, need_mask, approx):
    """Build the loss kernel, closing over all static shape parameters."""

    def kernel(a_ref, b_ref, c_ref, out_ref, acc_ref):
        ci = pl.program_id(0)   # "parallel" core axis (size 1 or 2)
        j = pl.program_id(1)    # "arbitrary" reduction axis over batch blocks

        @pl.when(j == 0)
        def _init():
            acc_ref[...] = jnp.zeros_like(acc_ref)

        def head_stats(ref, n_cls):
            # argmax(softmax(x)) == argmax(x); max_c softmax(x) == 1/denom with
            # denom = sum_k exp(x_k - max).  Two passes over the class axis keep
            # only ~3 live (TB, S) f32 slabs (VMEM re-reads are cheap: 3 vld/cyc).
            m = ref[:, 0, :].astype(jnp.float32)
            idx = jnp.zeros(m.shape, jnp.int32)
            for k in range(1, n_cls):
                xk = ref[:, k, :].astype(jnp.float32)
                gt = xk > m          # strict '>' keeps the first maximal index
                m = jnp.where(gt, xk, m)
                idx = jnp.where(gt, jnp.int32(k), idx)
            denom = jnp.exp(ref[:, 0, :].astype(jnp.float32) - m)
            for k in range(1, n_cls):
                denom = denom + jnp.exp(ref[:, k, :].astype(jnp.float32) - m)
            return idx, denom

        idx_a, denom_a = head_stats(a_ref, C)
        idx_b, denom_b = head_stats(b_ref, C)
        unchange = idx_a == idx_b

        # SCD = 0.5*(max softmax_A + max softmax_B) = 0.5*(1/denom_A + 1/denom_B)
        scd = 0.5 * (pl.reciprocal(denom_a, approx=approx) +
                     pl.reciprocal(denom_b, approx=approx))

        if Cc == 2:
            # Binary change head: 2-class softmax == numerically-stable sigmoid.
            c0 = c_ref[:, 0, :].astype(jnp.float32)
            c1 = c_ref[:, 1, :].astype(jnp.float32)
            d = c0 - c1
            z = jnp.exp(-jnp.abs(d))                       # one exp per pixel
            r = pl.reciprocal(1.0 + z, approx=approx)
            # cd = where(unchange == (d>=0), r, z*r)
            take_r = jnp.logical_not(jnp.logical_xor(unchange, d >= 0.0))
            cd = jnp.where(take_r, r, z * r)
        else:
            m = c_ref[:, 0, :].astype(jnp.float32)
            for k in range(1, Cc):
                m = jnp.maximum(m, c_ref[:, k, :].astype(jnp.float32))
            e0 = jnp.exp(c_ref[:, 0, :].astype(jnp.float32) - m)
            e1 = jnp.exp(c_ref[:, 1, :].astype(jnp.float32) - m)
            denom_c = e0 + e1
            for k in range(2, Cc):
                denom_c = denom_c + jnp.exp(c_ref[:, k, :].astype(jnp.float32) - m)
            cd = jnp.where(unchange, e0, e1) * pl.reciprocal(denom_c, approx=approx)

        diff = scd - cd
        sq = diff * diff

        if need_mask:
            # Row mask is only needed (and only evaluated) on ragged / duplicate
            # blocks — saves the iota + compare + select on every other step.
            base = (ci * NBh + j) * TB
            ragged = base + TB > N

            @pl.when(ragged)
            def _masked():
                row = jax.lax.broadcasted_iota(jnp.int32, (TB, S), 0)
                acc_ref[...] += jnp.where((base + row) < N, sq, jnp.float32(0.0))

            @pl.when(jnp.logical_not(ragged))
            def _dense():
                acc_ref[...] += sq
        else:
            acc_ref[...] += sq   # pure VPU accumulate; no per-step XLU reduce

        @pl.when(j == NBh - 1)
        def _finalize():
            # Single cross-lane reduce + lane-dense (8,128) store, once per core.
            out_ref[0] = jnp.full((8, 128), jnp.sum(acc_ref[...]), jnp.float32)

    return kernel


def logit_interaction_loss(out_A, out_B, out_change, *, approx_reciprocal=False):
    N, C, H, W = out_A.shape
    Cc = out_change.shape[1]
    assert Cc >= 2, "change head needs at least 2 classes"
    S = H * W

    # Free reshapes only — no jnp.pad / transpose copies in HBM.
    a = out_A.reshape(N, C, S)
    b = out_B.reshape(N, C, S)
    c = out_change.reshape(N, Cc, S)

    itemsize = jnp.dtype(out_A.dtype).itemsize
    S_pad = pl.cdiv(S, 128) * 128      # lane padding (VMEM layout only, not HBM)
    pad_c = pl.cdiv(C, 8) * 8          # sublane padding of the class axis in VMEM
    pad_cc = pl.cdiv(Cc, 8) * 8

    # ---- generation-aware VMEM budget (v5e/v6e: 128 MiB phys, v7x: 64 MiB) ----
    vmem_cap = _vmem_capacity_bytes()
    vmem_limit = int(min(vmem_cap * 3 // 4, 112 * 1024 * 1024))

    # ---- tile sizing: per-step input tiles up to ~12 MiB, with double-buffered
    # ---- inputs + f32 accumulator + compute temporaries kept under the limit.
    in_row_bytes = (2 * pad_c + pad_cc) * S_pad * itemsize   # per batch row / buffer
    live_row_bytes = 2 * in_row_bytes + 12 * S_pad * 4       # 2x buffers + acc + temps
    budget = vmem_limit - 4 * 1024 * 1024                    # fixed reserve
    TB = max(1, min(N, budget // live_row_bytes))
    TB = max(1, min(TB, (12 * 1024 * 1024) // max(1, in_row_bytes)))
    if TB >= 8:
        TB = (TB // 8) * 8             # fill sublanes when the batch allows it
    # TODO(synk): add a spatial grid axis (tile S) if a single batch row ever
    # exceeds the per-step budget (H*W on the order of 10^6); not needed here.

    NB = pl.cdiv(N, TB)                              # number of batch blocks
    NCORES = _num_tensorcores() if NB >= 2 else 1    # 2 only when it can help
    NBh = pl.cdiv(NB, NCORES)
    need_mask = (NCORES * NBh * TB) != N             # ragged or duplicate blocks

    if NCORES * NBh == NB:
        def in_map(ci, j):
            return (ci * NBh + j, 0, 0)
    else:
        # Odd block count on 2 cores: clamp instead of padding the batch in HBM.
        def in_map(ci, j):
            return (jnp.minimum(ci * NBh + j, NB - 1), 0, 0)

    kernel = _make_kernel(N, C, Cc, S, TB, NBh, need_mask, approx_reciprocal)

    n_exp = 2 * C + (1 if Cc == 2 else Cc)
    cost = pl.CostEstimate(
        flops=int(N * S * (8 * C + 4 * Cc + 16)),
        transcendentals=int(N * S * n_exp),
        bytes_accessed=int((2 * C + Cc) * N * S * itemsize + NCORES * 8 * 128 * 4),
    )

    partial = pl.pallas_call(
        kernel,
        out_shape=jax.ShapeDtypeStruct((NCORES, 8, 128), jnp.float32),
        grid_spec=pltpu.PrefetchScalarGridSpec(
            num_scalar_prefetch=0,
            grid=(NCORES, NBh),
            in_specs=[
                # Full class / spatial extents => legal blocks with no HBM padding.
                pl.BlockSpec((TB, C, S), in_map),
                pl.BlockSpec((TB, C, S), in_map),
                pl.BlockSpec((TB, Cc, S), in_map),
            ],
            out_specs=pl.BlockSpec((1, 8, 128), lambda ci, j: (ci, 0, 0)),
            scratch_shapes=[pltpu.VMEM((TB, S), jnp.float32)],
        ),
        compiler_params=pltpu.CompilerParams(
            dimension_semantics=("parallel", "arbitrary"),
            vmem_limit_bytes=vmem_limit,
        ),
        cost_estimate=cost,
    )(a, b, c)

    sse = jnp.sum(partial[:, 0, 0])          # per-core partial SSEs
    return sse / jnp.float32(N * H * W)      # MSE over the (N, H, W) tensors


def _reference(out_A, out_B, out_change):
    la = jax.nn.softmax(out_A, axis=1)
    lb = jax.nn.softmax(out_B, axis=1)
    lc = jax.nn.softmax(out_change, axis=1)
    pred_a = jnp.argmax(la, axis=1)
    pred_b = jnp.argmax(lb, axis=1)
    unchange = pred_a == pred_b
    cd = jnp.where(unchange, lc[:, 0], lc[:, 1])
    scd = 0.5 * (jnp.max(la, axis=1) + jnp.max(lb, axis=1))
    return jnp.mean((scd - cd) ** 2)


if __name__ == "__main__":
    key = jax.random.PRNGKey(0)
    kA, kB, kC = jax.random.split(key, 3)

    N, C, H, W = 2, 4, 16, 16            # semantic logits: 4 classes
    out_A = jax.random.normal(kA, (N, C, H, W), dtype=jnp.float32)
    out_B = jax.random.normal(kB, (N, C, H, W), dtype=jnp.float32)
    out_change = jax.random.normal(kC, (N, 2, H, W), dtype=jnp.float32)  # binary change head

    loss = jax.block_until_ready(logit_interaction_loss(out_A, out_B, out_change))
    ref = jax.block_until_ready(_reference(out_A, out_B, out_change))

    assert jnp.allclose(loss, ref, rtol=1e-5, atol=1e-6), (loss, ref)
    print("KERNEL_OK")
</pallas_src>

<mosaic_0001>
module attributes {stable_mosaic.version = 11 : i64} {
  func.func @kernel(%arg0: i32, %arg1: i32, %arg2: memref<2x4x256xf32, #tpu.memory_space<vmem>>, %arg3: memref<2x4x256xf32, #tpu.memory_space<vmem>>, %arg4: memref<2x2x256xf32, #tpu.memory_space<vmem>>, %arg5: memref<1x8x128xf32, #tpu.memory_space<vmem>>, %arg6: memref<2x256xf32, #tpu.memory_space<vmem>>) attributes {dimension_semantics = [#tpu.dimension_semantics<parallel>, #tpu.dimension_semantics<arbitrary>], iteration_bounds = array<i64: 1, 1>, scalar_prefetch = 0 : i64, scratch_operands = 1 : i64, tpu.core_type = #tpu.core_type<tc>, window_params = [{transform_indices = @transform_0, window_bounds = array<i64: 2, 4, 256>}, {transform_indices = @transform_1, window_bounds = array<i64: 2, 4, 256>}, {transform_indices = @transform_2, window_bounds = array<i64: 2, 2, 256>}, {transform_indices = @transform_3, window_bounds = array<i64: 1, 8, 128>}]} {
    %c0_i32 = arith.constant 0 : i32
    %0 = arith.cmpi eq, %arg1, %c0_i32 : i32
    %1 = arith.extui %0 : i1 to i32
    %c0_i32_0 = arith.constant 0 : i32
    %2 = arith.cmpi ne, %1, %c0_i32_0 : i32
    scf.if %2 {
      %cst_66 = arith.constant 0.000000e+00 : f32
      %115 = vector.broadcast %cst_66 : f32 to vector<2x256xf32>
      %c0_67 = arith.constant 0 : index
      %c0_68 = arith.constant 0 : index
      %116 = vector.load %arg6[%c0_67, %c0_68] : memref<2x256xf32, #tpu.memory_space<vmem>>, vector<2x256xf32>
      tpu.vector_store %arg6[%c0_67, %c0_68], %115 {strides = array<i32>} : memref<2x256xf32, #tpu.memory_space<vmem>>, vector<2x256xf32>,
    } else {
    }
    %c0 = arith.constant 0 : index
    %c0_1 = arith.constant 0 : index
    %c0_2 = arith.constant 0 : index
    %3 = vector.load %arg2[%c0, %c0_1, %c0_2] : memref<2x4x256xf32, #tpu.memory_space<vmem>>, vector<2x1x256xf32>
    %4 = vector.shape_cast %3 : vector<2x1x256xf32> to vector<2x256xf32>
    %c0_i32_3 = arith.constant 0 : i32
    %5 = vector.broadcast %c0_i32_3 : i32 to vector<2x256xi32>
    %c0_4 = arith.constant 0 : index
    %c1 = arith.constant 1 : index
    %c0_5 = arith.constant 0 : index
    %6 = vector.load %arg2[%c0_4, %c1, %c0_5] : memref<2x4x256xf32, #tpu.memory_space<vmem>>, vector<2x1x256xf32>
    %7 = vector.shape_cast %6 : vector<2x1x256xf32> to vector<2x256xf32>
    %8 = arith.cmpf ogt, %7, %4 : vector<2x256xf32>
    %9 = arith.select %8, %7, %4 : vector<2x256xi1>, vector<2x256xf32>
    %c1_i32 = arith.constant 1 : i32
    %10 = vector.broadcast %c1_i32 : i32 to vector<2x256xi32>
    %11 = arith.select %8, %10, %5 : vector<2x256xi1>, vector<2x256xi32>
    %c0_6 = arith.constant 0 : index
    %c2 = arith.constant 2 : index
    %c0_7 = arith.constant 0 : index
    %12 = vector.load %arg2[%c0_6, %c2, %c0_7] : memref<2x4x256xf32, #tpu.memory_space<vmem>>, vector<2x1x256xf32>
    %13 = vector.shape_cast %12 : vector<2x1x256xf32> to vector<2x256xf32>
    %14 = arith.cmpf ogt, %13, %9 : vector<2x256xf32>
    %15 = arith.select %14, %13, %9 : vector<2x256xi1>, vector<2x256xf32>
    %c2_i32 = arith.constant 2 : i32
    %16 = vector.broadcast %c2_i32 : i32 to vector<2x256xi32>
    %17 = arith.select %14, %16, %11 : vector<2x256xi1>, vector<2x256xi32>
    %c0_8 = arith.constant 0 : index
    %c3 = arith.constant 3 : index
    %c0_9 = arith.constant 0 : index
    %18 = vector.load %arg2[%c0_8, %c3, %c0_9] : memref<2x4x256xf32, #tpu.memory_space<vmem>>, vector<2x1x256xf32>
    %19 = vector.shape_cast %18 : vector<2x1x256xf32> to vector<2x256xf32>
    %20 = arith.cmpf ogt, %19, %15 : vector<2x256xf32>
    %21 = arith.select %20, %19, %15 : vector<2x256xi1>, vector<2x256xf32>
    %c3_i32 = arith.constant 3 : i32
    %22 = vector.broadcast %c3_i32 : i32 to vector<2x256xi32>
    %23 = arith.select %20, %22, %17 : vector<2x256xi1>, vector<2x256xi32>
    %c0_10 = arith.constant 0 : index
    %c0_11 = arith.constant 0 : index
    %c0_12 = arith.constant 0 : index
    %24 = vector.load %arg2[%c0_10, %c0_11, %c0_12] : memref<2x4x256xf32, #tpu.memory_space<vmem>>, vector<2x1x256xf32>
    %25 = vector.shape_cast %24 : vector<2x1x256xf32> to vector<2x256xf32>
    %26 = arith.subf %25, %21 : vector<2x256xf32>
    %27 = math.exp %26 : vector<2x256xf32>
    %c0_13 = arith.constant 0 : index
    %c1_14 = arith.constant 1 : index
    %c0_15 = arith.constant 0 : index
    %28 = vector.load %arg2[%c0_13, %c1_14, %c0_15] : memref<2x4x256xf32, #tpu.memory_space<vmem>>, vector<2x1x256xf32>
    %29 = vector.shape_cast %28 : vector<2x1x256xf32> to vector<2x256xf32>
    %30 = arith.subf %29, %21 : vector<2x256xf32>
    %31 = math.exp %30 : vector<2x256xf32>
    %32 = arith.addf %27, %31 : vector<2x256xf32>
    %c0_16 = arith.constant 0 : index
    %c2_17 = arith.constant 2 : index
    %c0_18 = arith.constant 0 : index
    %33 = vector.load %arg2[%c0_16, %c2_17, %c0_18] : memref<2x4x256xf32, #tpu.memory_space<vmem>>, vector<2x1x256xf32>
    %34 = vector.shape_cast %33 : vector<2x1x256xf32> to vector<2x256xf32>
    %35 = arith.subf %34, %21 : vector<2x256xf32>
    %36 = math.exp %35 : vector<2x256xf32>
    %37 = arith.addf %32, %36 : vector<2x256xf32>
    %c0_19 = arith.constant 0 : index
    %c3_20 = arith.constant 3 : index
    %c0_21 = arith.constant 0 : index
    %38 = vector.load %arg2[%c0_19, %c3_20, %c0_21] : memref<2x4x256xf32, #tpu.memory_space<vmem>>, vector<2x1x256xf32>
    %39 = vector.shape_cast %38 : vector<2x1x256xf32> to vector<2x256xf32>
    %40 = arith.subf %39, %21 : vector<2x256xf32>
    %41 = math.exp %40 : vector<2x256xf32>
    %42 = arith.addf %37, %41 : vector<2x256xf32>
    %c0_22 = arith.constant 0 : index
    %c0_23 = arith.constant 0 : index
    %c0_24 = arith.constant 0 : index
    %43 = vector.load %arg3[%c0_22, %c0_23, %c0_24] : memref<2x4x256xf32, #tpu.memory_space<vmem>>, vector<2x1x256xf32>
    %44 = vector.shape_cast %43 : vector<2x1x256xf32> to vector<2x256xf32>
    %c0_i32_25 = arith.constant 0 : i32
    %45 = vector.broadcast %c0_i32_25 : i32 to vector<2x256xi32>
    %c0_26 = arith.constant 0 : index
    %c1_27 = arith.constant 1 : index
    %c0_28 = arith.constant 0 : index
    %46 = vector.load %arg3[%c0_26, %c1_27, %c0_28] : memref<2x4x256xf32, #tpu.memory_space<vmem>>, vector<2x1x256xf32>
    %47 = vector.shape_cast %46 : vector<2x1x256xf32> to vector<2x256xf32>
    %48 = arith.cmpf ogt, %47, %44 : vector<2x256xf32>
    %49 = arith.select %48, %47, %44 : vector<2x256xi1>, vector<2x256xf32>
    %c1_i32_29 = arith.constant 1 : i32
    %50 = vector.broadcast %c1_i32_29 : i32 to vector<2x256xi32>
    %51 = arith.select %48, %50, %45 : vector<2x256xi1>, vector<2x256xi32>
    %c0_30 = arith.constant 0 : index
    %c2_31 = arith.constant 2 : index
    %c0_32 = arith.constant 0 : index
    %52 = vector.load %arg3[%c0_30, %c2_31, %c0_32] : memref<2x4x256xf32, #tpu.memory_space<vmem>>, vector<2x1x256xf32>
    %53 = vector.shape_cast %52 : vector<2x1x256xf32> to vector<2x256xf32>
    %54 = arith.cmpf ogt, %53, %49 : vector<2x256xf32>
    %55 = arith.select %54, %53, %49 : vector<2x256xi1>, vector<2x256xf32>
    %c2_i32_33 = arith.constant 2 : i32
    %56 = vector.broadcast %c2_i32_33 : i32 to vector<2x256xi32>
    %57 = arith.select %54, %56, %51 : vector<2x256xi1>, vector<2x256xi32>
    %c0_34 = arith.constant 0 : index
    %c3_35 = arith.constant 3 : index
    %c0_36 = arith.constant 0 : index
    %58 = vector.load %arg3[%c0_34, %c3_35, %c0_36] : memref<2x4x256xf32, #tpu.memory_space<vmem>>, vector<2x1x256xf32>
    %59 = vector.shape_cast %58 : vector<2x1x256xf32> to vector<2x256xf32>
    %60 = arith.cmpf ogt, %59, %55 : vector<2x256xf32>
    %61 = arith.select %60, %59, %55 : vector<2x256xi1>, vector<2x256xf32>
    %c3_i32_37 = arith.constant 3 : i32
    %62 = vector.broadcast %c3_i32_37 : i32 to vector<2x256xi32>
    %63 = arith.select %60, %62, %57 : vector<2x256xi1>, vector<2x256xi32>
    %c0_38 = arith.constant 0 : index
    %c0_39 = arith.constant 0 : index
    %c0_40 = arith.constant 0 : index
    %64 = vector.load %arg3[%c0_38, %c0_39, %c0_40] : memref<2x4x256xf32, #tpu.memory_space<vmem>>, vector<2x1x256xf32>
    %65 = vector.shape_cast %64 : vector<2x1x256xf32> to vector<2x256xf32>
    %66 = arith.subf %65, %61 : vector<2x256xf32>
    %67 = math.exp %66 : vector<2x256xf32>
    %c0_41 = arith.constant 0 : index
    %c1_42 = arith.constant 1 : index
    %c0_43 = arith.constant 0 : index
    %68 = vector.load %arg3[%c0_41, %c1_42, %c0_43] : memref<2x4x256xf32, #tpu.memory_space<vmem>>, vector<2x1x256xf32>
    %69 = vector.shape_cast %68 : vector<2x1x256xf32> to vector<2x256xf32>
    %70 = arith.subf %69, %61 : vector<2x256xf32>
    %71 = math.exp %70 : vector<2x256xf32>
    %72 = arith.addf %67, %71 : vector<2x256xf32>
    %c0_44 = arith.constant 0 : index
    %c2_45 = arith.constant 2 : index
    %c0_46 = arith.constant 0 : index
    %73 = vector.load %arg3[%c0_44, %c2_45, %c0_46] : memref<2x4x256xf32, #tpu.memory_space<vmem>>, vector<2x1x256xf32>
    %74 = vector.shape_cast %73 : vector<2x1x256xf32> to vector<2x256xf32>
    %75 = arith.subf %74, %61 : vector<2x256xf32>
    %76 = math.exp %75 : vector<2x256xf32>
    %77 = arith.addf %72, %76 : vector<2x256xf32>
    %c0_47 = arith.constant 0 : index
    %c3_48 = arith.constant 3 : index
    %c0_49 = arith.constant 0 : index
    %78 = vector.load %arg3[%c0_47, %c3_48, %c0_49] : memref<2x4x256xf32, #tpu.memory_space<vmem>>, vector<2x1x256xf32>
    %79 = vector.shape_cast %78 : vector<2x1x256xf32> to vector<2x256xf32>
    %80 = arith.subf %79, %61 : vector<2x256xf32>
    %81 = math.exp %80 : vector<2x256xf32>
    %82 = arith.addf %77, %81 : vector<2x256xf32>
    %83 = arith.cmpi eq, %23, %63 : vector<2x256xi32>
    %84 = tpu.reciprocal %42 : vector<2x256xf32> -> vector<2x256xf32>
    %85 = tpu.reciprocal %82 : vector<2x256xf32> -> vector<2x256xf32>
    %86 = arith.addf %84, %85 : vector<2x256xf32>
    %cst = arith.constant 5.000000e-01 : f32
    %87 = vector.broadcast %cst : f32 to vector<2x256xf32>
    %88 = arith.mulf %87, %86 : vector<2x256xf32>
    %c0_50 = arith.constant 0 : index
    %c0_51 = arith.constant 0 : index
    %c0_52 = arith.constant 0 : index
    %89 = vector.load %arg4[%c0_50, %c0_51, %c0_52] : memref<2x2x256xf32, #tpu.memory_space<vmem>>, vector<2x1x256xf32>
    %90 = vector.shape_cast %89 : vector<2x1x256xf32> to vector<2x256xf32>
    %c0_53 = arith.constant 0 : index
    %c1_54 = arith.constant 1 : index
    %c0_55 = arith.constant 0 : index
    %91 = vector.load %arg4[%c0_53, %c1_54, %c0_55] : memref<2x2x256xf32, #tpu.memory_space<vmem>>, vector<2x1x256xf32>
    %92 = vector.shape_cast %91 : vector<2x1x256xf32> to vector<2x256xf32>
    %93 = arith.subf %90, %92 : vector<2x256xf32>
    %94 = math.absf %93 : vector<2x256xf32>
    %cst_56 = arith.constant 0.000000e+00 : f32
    %95 = vector.broadcast %cst_56 : f32 to vector<2x256xf32>
    %96 = arith.subf %95, %94 : vector<2x256xf32>
    %97 = math.exp %96 : vector<2x256xf32>
    %cst_57 = arith.constant 1.000000e+00 : f32
    %98 = vector.broadcast %cst_57 : f32 to vector<2x256xf32>
    %99 = arith.addf %98, %97 : vector<2x256xf32>
    %100 = tpu.reciprocal %99 : vector<2x256xf32> -> vector<2x256xf32>
    %cst_58 = arith.constant 0.000000e+00 : f32
    %101 = vector.broadcast %cst_58 : f32 to vector<2x256xf32>
    %102 = arith.cmpf oge, %93, %101 : vector<2x256xf32>
    %103 = arith.xori %83, %102 : vector<2x256xi1>
    %cst_59 = arith.constant dense<true> : vector<2x256xi1>
    %104 = arith.xori %103, %cst_59 : vector<2x256xi1>
    %105 = arith.mulf %97, %100 : vector<2x256xf32>
    %106 = arith.select %104, %100, %105 : vector<2x256xi1>, vector<2x256xf32>
    %107 = arith.subf %88, %106 : vector<2x256xf32>
    %108 = arith.mulf %107, %107 : vector<2x256xf32>
    %c0_60 = arith.constant 0 : index
    %c0_61 = arith.constant 0 : index
    %109 = vector.load %arg6[%c0_60, %c0_61] : memref<2x256xf32, #tpu.memory_space<vmem>>, vector<2x256xf32>
    %110 = arith.addf %109, %108 : vector<2x256xf32>
    %c0_62 = arith.constant 0 : index
    %c0_63 = arith.constant 0 : index
    %111 = vector.load %arg6[%c0_62, %c0_63] : memref<2x256xf32, #tpu.memory_space<vmem>>, vector<2x256xf32>
    tpu.vector_store %arg6[%c0_62, %c0_63], %110 {strides = array<i32>} : memref<2x256xf32, #tpu.memory_space<vmem>>, vector<2x256xf32>,
    %c0_i32_64 = arith.constant 0 : i32
    %112 = arith.cmpi eq, %arg1, %c0_i32_64 : i32
    %113 = arith.extui %112 : i1 to i32
    %c0_i32_65 = arith.constant 0 : i32
    %114 = arith.cmpi ne, %113, %c0_i32_65 : i32
    scf.if %114 {
      %c0_66 = arith.constant 0 : index
      %c0_67 = arith.constant 0 : index
      %115 = vector.load %arg6[%c0_66, %c0_67] : memref<2x256xf32, #tpu.memory_space<vmem>>, vector<2x256xf32>
      %116 = vector.shape_cast %115 : vector<2x256xf32> to vector<1x2x256xf32>
      %cst_68 = arith.constant dense<0.000000e+00> : vector<1xf32>
      %117 = vector.multi_reduction <add>, %116, %cst_68 [1, 2] : vector<1x2x256xf32> to vector<1xf32>
      %118 = vector.shape_cast %117 : vector<1xf32> to vector<1x1x1xf32>
      %119 = vector.extract %118[0, 0, 0] : f32 from vector<1x1x1xf32>
      %120 = vector.broadcast %119 : f32 to vector<8x128xf32>
      %c0_69 = arith.constant 0 : index
      %c0_70 = arith.constant 0 : index
      %c0_71 = arith.constant 0 : index
      %121 = vector.load %arg5[%c0_69, %c0_70, %c0_71] : memref<1x8x128xf32, #tpu.memory_space<vmem>>, vector<1x8x128xf32>
      %122 = vector.shape_cast %121 : vector<1x8x128xf32> to vector<8x128xf32>
      %123 = vector.shape_cast %120 : vector<8x128xf32> to vector<1x8x128xf32>
      tpu.vector_store %arg5[%c0_69, %c0_70, %c0_71], %123 {strides = array<i32>} : memref<1x8x128xf32, #tpu.memory_space<vmem>>, vector<1x8x128xf32>,
    } else {
    }
    return
  }
  func.func @transform_0(%arg0: i32, %arg1: i32) -> (i32, i32, i32) {
    %c1_i32 = arith.constant 1 : i32
    %0 = arith.muli %arg0, %c1_i32 : i32
    %1 = arith.addi %0, %arg1 : i32
    %c0_i32 = arith.constant 0 : i32
    %c0_i32_0 = arith.constant 0 : i32
    %c0_i32_1 = arith.constant 0 : i32
    return %1, %c0_i32, %c0_i32_0 : i32, i32, i32
  }
  func.func @transform_1(%arg0: i32, %arg1: i32) -> (i32, i32, i32) {
    %c1_i32 = arith.constant 1 : i32
    %0 = arith.muli %arg0, %c1_i32 : i32
    %1 = arith.addi %0, %arg1 : i32
    %c0_i32 = arith.constant 0 : i32
    %c0_i32_0 = arith.constant 0 : i32
    %c0_i32_1 = arith.constant 0 : i32
    return %1, %c0_i32, %c0_i32_0 : i32, i32, i32
  }
  func.func @transform_2(%arg0: i32, %arg1: i32) -> (i32, i32, i32) {
    %c1_i32 = arith.constant 1 : i32
    %0 = arith.muli %arg0, %c1_i32 : i32
    %1 = arith.addi %0, %arg1 : i32
    %c0_i32 = arith.constant 0 : i32
    %c0_i32_0 = arith.constant 0 : i32
    %c0_i32_1 = arith.constant 0 : i32
    return %1, %c0_i32, %c0_i32_0 : i32, i32, i32
  }
  func.func @transform_3(%arg0: i32, %arg1: i32) -> (i32, i32, i32) {
    %c0_i32 = arith.constant 0 : i32
    %c0_i32_0 = arith.constant 0 : i32
    %c0_i32_1 = arith.constant 0 : i32
    return %arg0, %c0_i32, %c0_i32_0 : i32, i32, i32
  }
}

</mosaic_0001>

<llo_original>
// kernel: tpu_custom_call.1
$region0: #{tpu_custom_call.1}
  #allocation0 [shape = 'u32[]', space=smem, size = 0x4, offset = 0x4, fixed_abs, tag = 'smem constant byte address 0x4 - core index']
  #allocation1 [shape = 'u32[144,128]{1,0:T(1,128)}', space=vmem, size = 0x12000, scoped, tag = 'internal scratch']
  #allocation2 [shape = 'f32[2,256]{1,0:T(2,128)}', space=vmem, size = 0x800, scoped, tag = 'scratch operand']
  %s0 = inlined_call_operand.hbm [shape: f32[2,4,256], index: 0, kind: input, shape index: {}]
  %s1 = inlined_call_operand.hbm [shape: f32[2,4,256], index: 1, kind: input, shape index: {}]
  %s2 = inlined_call_operand.hbm [shape: f32[2,2,256], index: 2, kind: input, shape index: {}]
  %s3 = inlined_call_operand.hbm [shape: f32[1,8,128], index: 3, kind: output, shape index: {}]
  %s4 = sld [smem:[#allocation0]]
  $region42: #{tpu_custom_call.1} parent=0
    _
  %s6 = ssub.s32 1, %s4
  %s7 = scalar_select 0, %s6, %s4
  $region1: #{tpu_custom_call.1} parent=0
    #allocation3 [shape = 'u8[8192]{0}', space=vmem, size = 0x2000, scoped, tag = 'input window, operand 0, single buffered']
    #allocation4 [shape = 's32[1]{0}', space=sflag, size = 0x4, scoped, tag = 'scoped memory for tpu_custom_call.1']
    #allocation5 [shape = 's32[1]{0}', space=sflag, size = 0x4, scoped, tag = 'scoped memory for tpu_custom_call.1']
    #allocation6 [shape = 'u8[8192]{0}', space=vmem, size = 0x2000, scoped, tag = 'input window, operand 1, single buffered']
    #allocation7 [shape = 's32[1]{0}', space=sflag, size = 0x4, scoped, tag = 'scoped memory for tpu_custom_call.1']
    #allocation8 [shape = 'u8[4096]{0}', space=vmem, size = 0x1000, scoped, tag = 'input window, operand 2, single buffered']
    #allocation9 [shape = 'u8[4096]{0}', space=vmem, size = 0x1000, scoped, tag = 'output window, operand 0, single buffered']
    %8 = vsyncpa [#allocation4], 0
    %9 = vsyncpa [#allocation7], 0
    %10 = vsyncpa [#allocation5], 0
    // Predicated region
    $region2: #{tpu_custom_call.1} parent=1 // pred_check
      _
    $region3: #{tpu_custom_call.1} parent=1 // pred_check_branch
      %12 = sbr.rel (0) target = $region5
    $region4: #{tpu_custom_call.1} parent=1 // pred_region
      %s13 = sadd.s32 0, 0
      %s14 = smul.u32 2, %s13
      %s16 = ssub.s32 256, 256
      %17 = vsyncadd [#allocation4], %s16
      %s18 = smul.addr %s14, 2
      %s19 = smul.addr %s18, 64
      %s20 = scalar_lea.hbm %s0, %s19
      %s21 = sshll.u32 [#allocation3], 4
      %s22 = int_to_ptr.vmem [resolvable:$true] %s21
      %27 = dma.hbm_to_vmem [thread:$0]  %s20, 256, %s22, [#allocation4], 128, 128, 8
    $region5: #{tpu_custom_call.1} parent=1 // pred_fallthru
      _
    // Predicated region
    $region6: #{tpu_custom_call.1} parent=1 // pred_check
      _
    $region7: #{tpu_custom_call.1} parent=1 // pred_check_branch
      %29 = sbr.rel (0) target = $region9
    $region8: #{tpu_custom_call.1} parent=1 // pred_region
      %s30 = sadd.s32 0, 0
      %s31 = smul.u32 2, %s30
      %s33 = ssub.s32 256, 256
      %34 = vsyncadd [#allocation7], %s33
      %s35 = smul.addr %s31, 2
      %s36 = smul.addr %s35, 64
      %s37 = scalar_lea.hbm %s1, %s36
      %s38 = sshll.u32 [#allocation6], 4
      %s39 = int_to_ptr.vmem [resolvable:$true] %s38
      %44 = dma.hbm_to_vmem [thread:$0]  %s37, 256, %s39, [#allocation7], 128, 128, 8
    $region9: #{tpu_custom_call.1} parent=1 // pred_fallthru
      _
    // Predicated region
    $region10: #{tpu_custom_call.1} parent=1 // pred_check
      _
    $region11: #{tpu_custom_call.1} parent=1 // pred_check_branch
      %46 = sbr.rel (0) target = $region13
    $region12: #{tpu_custom_call.1} parent=1 // pred_region
      %s47 = sadd.s32 0, 0
      %s48 = smul.u32 2, %s47
      %s50 = ssub.s32 128, 128
      %51 = vsyncadd [#allocation7], %s50
      %s52 = smul.addr %s48, 2
      %s53 = smul.addr %s52, 32
      %s54 = scalar_lea.hbm %s2, %s53
      %s55 = sshll.u32 [#allocation8], 4
      %s56 = int_to_ptr.vmem [resolvable:$true] %s55
      %61 = dma.hbm_to_vmem [thread:$0]  %s54, 128, %s56, [#allocation7], 64, 64, 4
    $region13: #{tpu_custom_call.1} parent=1 // pred_fallthru
      _
    // Predicated region
    $region14: #{tpu_custom_call.1} parent=1 // pred_check
      _
    $region15: #{tpu_custom_call.1} parent=1 // pred_check_branch
      %63 = sbr.rel (0) target = $region17
    $region16: #{tpu_custom_call.1} parent=1 // pred_region
      %64 = dma.done [#allocation4], 256
    $region17: #{tpu_custom_call.1} parent=1 // pred_fallthru
      _
    // Predicated region
    $region18: #{tpu_custom_call.1} parent=1 // pred_check
      _
    $region19: #{tpu_custom_call.1} parent=1 // pred_check_branch
      %66 = sbr.rel (0) target = $region21
    $region20: #{tpu_custom_call.1} parent=1 // pred_region
      %67 = dma.done [#allocation7], 256
    $region21: #{tpu_custom_call.1} parent=1 // pred_fallthru
      _
    // Predicated region
    $region22: #{tpu_custom_call.1} parent=1 // pred_check
      _
    $region23: #{tpu_custom_call.1} parent=1 // pred_check_branch
      %69 = sbr.rel (0) target = $region25
    $region24: #{tpu_custom_call.1} parent=1 // pred_region
      %70 = dma.done [#allocation7], 128
    $region25: #{tpu_custom_call.1} parent=1 // pred_fallthru
      _
    %s71 = sadd.s32 0, 0
    %s72 = smul.u32 2, %s71
    %s73 = sadd.s32 0, 0
    %s74 = smul.u32 2, %s73
    %s75 = sadd.s32 0, 0
    %s76 = smul.u32 2, %s75
    %p77 = scmp.eq.s32.totalorder 0, 0
    // Predicated region
    $region26: #{tpu_custom_call.1} parent=1 // pred_check
      %p78 = pneg %p77
    $region27: #{tpu_custom_call.1} parent=1 // pred_check_branch
      %80 = sbr.rel (%p78) target = $region29
    $region28: #{tpu_custom_call.1} parent=1 // pred_region
      %81 = vst [vmem:[#allocation2] sm:$0xf] 0.0
    $region29: #{tpu_custom_call.1} parent=1 // pred_fallthru
      _
    %v82 = vld [vmem:[#allocation3] ss:$4 sm:$0x3]
    %s83 = scalar_lea.vmem [#allocation3], 8
    %v84 = vld [vmem:[%s83] ss:$4 sm:$0x3]
    %s85 = scalar_lea.vmem [#allocation3], 1
    %v86 = vld [vmem:[%s85] ss:$4 sm:$0x3]
    %s87 = scalar_lea.vmem [#allocation3], 9
    %v88 = vld [vmem:[%s87] ss:$4 sm:$0x3]
    %vm89 = vcmp.gt.f32.partialorder %v86, %v82
    %vm90 = vcmp.gt.f32.partialorder %v88, %v84
    %v91 = vsel %vm89, %v86, %v82
    %v92 = vsel %vm90, %v88, %v84
    %v93 = vsel %vm89, 1, 0
    %v94 = vsel %vm90, 1, 0
    %s95 = scalar_lea.vmem [#allocation3], 2
    %v96 = vld [vmem:[%s95] ss:$4 sm:$0x3]
    %s97 = scalar_lea.vmem [#allocation3], 10
    %v98 = vld [vmem:[%s97] ss:$4 sm:$0x3]
    %vm99 = vcmp.gt.f32.partialorder %v96, %v91
    %vm100 = vcmp.gt.f32.partialorder %v98, %v92
    %v101 = vsel %vm99, %v96, %v91
    %v102 = vsel %vm100, %v98, %v92
    %v103 = vsel %vm99, 2, %v93
    %v104 = vsel %vm100, 2, %v94
    %s105 = scalar_lea.vmem [#allocation3], 3
    %v106 = vld [vmem:[%s105] ss:$4 sm:$0x3]
    %s107 = scalar_lea.vmem [#allocation3], 11
    %v108 = vld [vmem:[%s107] ss:$4 sm:$0x3]
    %vm109 = vcmp.gt.f32.partialorder %v106, %v101
    %vm110 = vcmp.gt.f32.partialorder %v108, %v102
    %v111 = vsel %vm109, %v106, %v101
    %v112 = vsel %vm110, %v108, %v102
    %v113 = vsel %vm109, 3, %v103
    %v114 = vsel %vm110, 3, %v104
    %v115 = vsub.f32 %v82, %v111
    %v116 = vsub.f32 %v84, %v112
    %v117 = vmul.f32 %v115, 1.442695
    %v118 = vpow.pop %v117
    %v119 = vmul.f32 %v116, 1.442695
    %v120 = vpow.pop %v119
    %v121 = vsub.f32 %v86, %v111
    %v122 = vsub.f32 %v88, %v112
    %v123 = vmul.f32 %v121, 1.442695
    %v124 = vpow.pop %v123
    %v125 = vmul.f32 %v122, 1.442695
    %v126 = vpow.pop %v125
    %v127 = vadd.f32 %v118, %v124
    %v128 = vadd.f32 %v120, %v126
    %v129 = vsub.f32 %v96, %v111
    %v130 = vsub.f32 %v98, %v112
    %v131 = vmul.f32 %v129, 1.442695
    %v132 = vpow.pop %v131
    %v133 = vmul.f32 %v130, 1.442695
    %v134 = vpow.pop %v133
    %v135 = vadd.f32 %v127, %v132
    %v136 = vadd.f32 %v128, %v134
    %v137 = vsub.f32 %v106, %v111
    %v138 = vsub.f32 %v108, %v112
    %v139 = vmul.f32 %v137, 1.442695
    %v140 = vpow.pop %v139
    %v141 = vmul.f32 %v138, 1.442695
    %v142 = vpow.pop %v141
    %v143 = vadd.f32 %v135, %v140
    %v144 = vadd.f32 %v136, %v142
    %v145 = vld [vmem:[#allocation6] ss:$4 sm:$0x3]
    %s146 = scalar_lea.vmem [#allocation6], 8
    %v147 = vld [vmem:[%s146] ss:$4 sm:$0x3]
    %s148 = scalar_lea.vmem [#allocation6], 1
    %v149 = vld [vmem:[%s148] ss:$4 sm:$0x3]
    %s150 = scalar_lea.vmem [#allocation6], 9
    %v151 = vld [vmem:[%s150] ss:$4 sm:$0x3]
    %vm152 = vcmp.gt.f32.partialorder %v149, %v145
    %vm153 = vcmp.gt.f32.partialorder %v151, %v147
    %v154 = vsel %vm152, %v149, %v145
    %v155 = vsel %vm153, %v151, %v147
    %v156 = vsel %vm152, 1, 0
    %v157 = vsel %vm153, 1, 0
    %s158 = scalar_lea.vmem [#allocation6], 2
    %v159 = vld [vmem:[%s158] ss:$4 sm:$0x3]
    %s160 = scalar_lea.vmem [#allocation6], 10
    %v161 = vld [vmem:[%s160] ss:$4 sm:$0x3]
    %vm162 = vcmp.gt.f32.partialorder %v159, %v154
    %vm163 = vcmp.gt.f32.partialorder %v161, %v155
    %v164 = vsel %vm162, %v159, %v154
    %v165 = vsel %vm163, %v161, %v155
    %v166 = vsel %vm162, 2, %v156
    %v167 = vsel %vm163, 2, %v157
    %s168 = scalar_lea.vmem [#allocation6], 3
    %v169 = vld [vmem:[%s168] ss:$4 sm:$0x3]
    %s170 = scalar_lea.vmem [#allocation6], 11
    %v171 = vld [vmem:[%s170] ss:$4 sm:$0x3]
    %vm172 = vcmp.gt.f32.partialorder %v169, %v164
    %vm173 = vcmp.gt.f32.partialorder %v171, %v165
    %v174 = vsel %vm172, %v169, %v164
    %v175 = vsel %vm173, %v171, %v165
    %v176 = vsel %vm172, 3, %v166
    %v177 = vsel %vm173, 3, %v167
    %v178 = vsub.f32 %v145, %v174
    %v179 = vsub.f32 %v147, %v175
    %v180 = vmul.f32 %v178, 1.442695
    %v181 = vpow.pop %v180
    %v182 = vmul.f32 %v179, 1.442695
    %v183 = vpow.pop %v182
    %v184 = vsub.f32 %v149, %v174
    %v185 = vsub.f32 %v151, %v175
    %v186 = vmul.f32 %v184, 1.442695
    %v187 = vpow.pop %v186
    %v188 = vmul.f32 %v185, 1.442695
    %v189 = vpow.pop %v188
    %v190 = vadd.f32 %v181, %v187
    %v191 = vadd.f32 %v183, %v189
    %v192 = vsub.f32 %v159, %v174
    %v193 = vsub.f32 %v161, %v175
    %v194 = vmul.f32 %v192, 1.442695
    %v195 = vpow.pop %v194
    %v196 = vmul.f32 %v193, 1.442695
    %v197 = vpow.pop %v196
    %v198 = vadd.f32 %v190, %v195
    %v199 = vadd.f32 %v191, %v197
    %v200 = vsub.f32 %v169, %v174
    %v201 = vsub.f32 %v171, %v175
    %v202 = vmul.f32 %v200, 1.442695
    %v203 = vpow.pop %v202
    %v204 = vmul.f32 %v201, 1.442695
    %v205 = vpow.pop %v204
    %v206 = vadd.f32 %v198, %v203
    %v207 = vadd.f32 %v199, %v205
    %vm208 = vcmp.eq.s32.totalorder %v113, %v176
    %vm209 = vcmp.eq.s32.totalorder %v114, %v177
    %v210 = vrcp.pop %v143
    %v211 = vrcp.pop %v144
    %v212 = vrcp.pop %v206
    %v213 = vrcp.pop %v207
    %v214 = vadd.f32 %v210, %v212
    %v215 = vadd.f32 %v211, %v213
    %v216 = vmul.f32 %v214, 0.5
    %v217 = vmul.f32 %v215, 0.5
    %v218 = vld [vmem:[#allocation8] ss:$2 sm:$0x3]
    %s219 = scalar_lea.vmem [#allocation8], 4
    %v220 = vld [vmem:[%s219] ss:$2 sm:$0x3]
    %s221 = scalar_lea.vmem [#allocation8], 1
    %v222 = vld [vmem:[%s221] ss:$2 sm:$0x3]
    %s223 = scalar_lea.vmem [#allocation8], 5
    %v224 = vld [vmem:[%s223] ss:$2 sm:$0x3]
    %v225 = vsub.f32 %v218, %v222
    %v226 = vsub.f32 %v220, %v224
    %v227 = vand.u32 2147483647, %v225
    %v228 = vand.u32 2147483647, %v226
    %v229 = vsub.f32 0.0, %v227
    %v230 = vsub.f32 0.0, %v228
    %v231 = vmul.f32 %v229, 1.442695
    %v232 = vpow.pop %v231
    %v233 = vmul.f32 %v230, 1.442695
    %v234 = vpow.pop %v233
    %v235 = vadd.f32 %v232, 1.0
    %v236 = vadd.f32 %v234, 1.0
    %v237 = vrcp.pop %v235
    %v238 = vrcp.pop %v236
    %vm239 = vcmp.ge.f32.partialorder %v225, 0.0
    %vm240 = vcmp.ge.f32.partialorder %v226, 0.0
    %vm241 = vmxor %vm208, %vm239
    %vm242 = vmxor %vm209, %vm240
    %vm243 = vmxor %vm241, 1
    %vm244 = vmxor %vm242, 1
    %v245 = vmul.f32 %v232, %v237
    %v246 = vmul.f32 %v234, %v238
    %v247 = vsel %vm243, %v237, %v245
    %v248 = vsel %vm244, %v238, %v246
    %v249 = vsub.f32 %v216, %v247
    %v250 = vsub.f32 %v217, %v248
    %v251 = vmul.f32 %v249, %v249
    %v252 = vmul.f32 %v250, %v250
    %v253 = vld [vmem:[#allocation2] sm:$0xf]
    %v256 = vcombine.low %v251, %v252
    %v258 = vunpack.c.l.s4 1935823168
    %v259 = vunpack.c.0.s8 %v258
    %v260 = vlaneseq
    %v261 = vshrl.u32 %v260, 7
    %v262 = vsub.s32 %v259, %v261
    %v263 = vrot.slane %v256, %v262
    %v265 = vadd.f32 %v253, %v263
    %266 = vst [vmem:[#allocation2] sm:$0xf] %v265
    // Predicated region
    $region30: #{tpu_custom_call.1} parent=1 // pred_check
      %p267 = pneg %p77
    $region31: #{tpu_custom_call.1} parent=1 // pred_check_branch
      %269 = sbr.rel (%p267) target = $region33
    $region32: #{tpu_custom_call.1} parent=1 // pred_region
      %v270 = vld [vmem:[#allocation2] sm:$0xf]
      %v273 = vunpack.c.l.s4 1983009808
      %v274 = vunpack.c.0.s8 %v273
      %v275 = vlaneseq
      %v276 = vshrl.u32 %v275, 7
      %v277 = vsub.s32 %v274, %v276
      %v278 = vrot.slane %v270, %v277
      %v279 = vcombine.high %v278, %v278
      %vm282 = vcmask 1041408
      %v283 = vsel %vm282, %v278, 0.0
      %v284 = vsel %vm282, %v279, 0.0
      %v285 = vadd.f32 %v283, %v284
      %286 = vadd.xlane.f32.xlu0 %v285
      %v287 = vpop.xlane.xlu0 %286
      %v288 = vrot.slane %v287, 4
      %v289 = vadd.f32 %v287, %v288
      %v290 = vrot.slane %v289, 2
      %v291 = vadd.f32 %v289, %v290
      %v292 = vrot.slane %v291, 1
      %v293 = vadd.f32 %v291, %v292
      %s294 = vtos %v293
      %v295 = vstv %s294
      %296 = vst [vmem:[#allocation9] sm:$0xff] %v295
    $region33: #{tpu_custom_call.1} parent=1 // pred_fallthru
      _
    // Predicated region
    $region34: #{tpu_custom_call.1} parent=1 // pred_check
      _
    $region35: #{tpu_custom_call.1} parent=1 // pred_check_branch
      %298 = sbr.rel (0) target = $region37
    $region36: #{tpu_custom_call.1} parent=1 // pred_region
      %s300 = ssub.s32 128, 128
      %301 = vsyncadd [#allocation5], %s300
      %s303 = sshll.u32 [#allocation9], 4
      %s304 = int_to_ptr.vmem [resolvable:$true] %s303
      %306 = dma.vmem_to_hbm [thread:$0]  %s304, 128, %s3, [#allocation5]
    $region37: #{tpu_custom_call.1} parent=1 // pred_fallthru
      _
    // Predicated region
    $region38: #{tpu_custom_call.1} parent=1 // pred_check
      _
    $region39: #{tpu_custom_call.1} parent=1 // pred_check_branch
      %308 = sbr.rel (0) target = $region41
    $region40: #{tpu_custom_call.1} parent=1 // pred_region
      %309 = dma.done [#allocation5], 128
    $region41: #{tpu_custom_call.1} parent=1 // pred_fallthru
      _
    %310 = vsyncpa [#allocation4], 1
    %311 = vsyncpa [#allocation7], 1
    %312 = vsyncpa [#allocation5], 1

</llo_original>
